<compile_context>
chip_gen: v6e
topology: v6e:2x2x1
jax: 0.10.0
libtpu: 0.0.40
codegen_flags: <defaults>
</compile_context>

<pallas_src>
import functools

import jax
import jax.numpy as jnp
from jax import lax
from jax.experimental import pallas as pl
from jax.experimental.pallas import tpu as pltpu


def _round_down(v, m):
    return (v // m) * m


def _pool_kernel(x_ref, o_ref, mx_ref, sm_ref, *, pooling, reduce_axis,
                 red_size, red_blk):
    """One grid step of global max / avg / combined pooling.

    x_ref : 3-D block; `reduce_axis` selects the pooled (spatial) axis, the
            other two axes are (batch, channels).
    o_ref : (b, c_blk) output block (written only at the last reduction step).
    mx_ref/sm_ref : (b, c_blk) float32 accumulators, persistent across the
            trailing ("arbitrary") reduction grid axis.
    """
    j = pl.program_id(2)          # position along the HW-reduction grid axis
    n_red = pl.num_programs(2)

    need_max = pooling in ("max", "combined")
    need_sum = pooling in ("avg", "combined")

    @pl.when(j == 0)
    def _init():
        if need_max:
            mx_ref[...] = jnp.full_like(mx_ref, -jnp.inf)
        if need_sum:
            sm_ref[...] = jnp.zeros_like(sm_ref)

    x = x_ref[...]                # native dtype — no wholesale f32 upcast

    if red_size % red_blk != 0:
        # Ragged last reduction block: mask padded spatial positions.
        pos = lax.broadcasted_iota(jnp.int32, x.shape, reduce_axis)
        valid = pos < (red_size - j * red_blk)
    else:
        valid = None

    if need_max:
        xm = x if valid is None else jnp.where(
            valid, x, jnp.array(-jnp.inf, dtype=x.dtype))
        mx_ref[...] = jnp.maximum(
            mx_ref[...], jnp.max(xm, axis=reduce_axis).astype(jnp.float32))
    if need_sum:
        xs = x if valid is None else jnp.where(
            valid, x, jnp.array(0, dtype=x.dtype))
        # f32 accumulation; the widening fuses into the reduce.
        sm_ref[...] = sm_ref[...] + jnp.sum(
            xs, axis=reduce_axis, dtype=jnp.float32)

    @pl.when(j == n_red - 1)
    def _finalize():
        if pooling == "max":
            out = mx_ref[...]
        elif pooling == "avg":
            out = sm_ref[...] * (1.0 / red_size)
        else:  # combined = max + avg
            out = mx_ref[...] + sm_ref[...] * (1.0 / red_size)
        o_ref[...] = out.astype(o_ref.dtype)


def baseline_reid_branch_forward(x_nchw, endpoints, pooling="combined",
                                 input_budget_bytes=None):
    """Pallas implementation of BaselineReidBranch.forward.

    x_nchw: (N, C, H, W) float array (PyTorch NCHW convention).
    Returns (endpoints, emb) with emb of shape (N, C), matching the module.
    `input_budget_bytes` optionally overrides the double-buffered input-block
    VMEM budget (used for testing the streamed-reduction fallback).
    """
    if pooling not in ("max", "avg", "combined"):
        raise ValueError(pooling)

    n, c, h, w = x_nchw.shape
    hw = h * w
    dtype = x_nchw.dtype
    itemsize = jnp.dtype(dtype).itemsize

    # ---- generation-aware VMEM budget --------------------------------------
    vmem_cap = 64 << 20                       # conservative default (v7x)
    try:
        info = pltpu.get_tpu_info()
        vmem_cap = int(getattr(info, "vmem_capacity_bytes", vmem_cap))
    except Exception:
        pass
    if input_budget_bytes is None:
        input_budget = int(0.35 * vmem_cap)   # double-buffered input block
    else:
        input_budget = int(input_budget_bytes)

    # ---- layout choice ------------------------------------------------------
    # Real ReID maps: C=2048 on lanes -> (N, HW, C), reduce over sublane axis.
    # Tiny-C / large-HW tensors: keep (N, C, HW), reduce over lanes.
    c_on_lanes = (c >= 128) or (c >= hw)
    if c_on_lanes:
        x = jnp.transpose(x_nchw, (0, 2, 3, 1)).reshape(n, hw, c)
        reduce_axis = 1
    else:
        x = x_nchw.reshape(n, c, hw)          # free contiguous reshape
        reduce_axis = 2

    # ---- block sizing -------------------------------------------------------
    red_blk = hw            # extent of the pooled (HW) axis per block
    c_blk = c               # channel extent per block (only tiled when on lanes)

    def in_block_bytes(bb, cc, rr):
        return bb * cc * rr * itemsize

    # Batch block: large (amortize per-step overhead, feed the HBM roofline),
    # multiple of 8, bounded only by the VMEM budget.  Pallas handles a ragged
    # last batch block, so b need not divide N.
    b = 128
    while b > 8 and 2 * in_block_bytes(b, c_blk, red_blk) > input_budget:
        b //= 2

    # Fallback for huge C*HW maps: tile the pooled axis and stream through the
    # f32 accumulators (keeps VMEM bounded on v7x's 64 MiB physical VMEM).
    if 2 * in_block_bytes(b, c_blk, red_blk) > input_budget:
        quantum = 8 if c_on_lanes else 128    # sublane vs lane alignment
        max_red = input_budget // max(1, 2 * b * c_blk * itemsize)
        red_blk = max(quantum, _round_down(max_red, quantum))
        if red_blk >= hw:
            red_blk = hw
        # Last resort: also tile C (requires C on lanes, multiples of 128).
        if (2 * in_block_bytes(b, c_blk, red_blk) > input_budget
                and c_on_lanes and c % 128 == 0):
            max_c = input_budget // max(1, 2 * b * red_blk * itemsize)
            c_blk = max(128, _round_down(max_c, 128))
            if c_blk >= c:
                c_blk = c

    # Never allocate a bigger batch block than the batch itself (b == n also
    # satisfies the sublane rule because it equals the full array dim).
    if n <= b:
        b = n

    n_b = pl.cdiv(n, b)

    # Megacore (v7x: 2 TCs): ensure >= 2 parallel grid steps when C allows.
    if (c_on_lanes and n_b * pl.cdiv(c, c_blk) < 2
            and c_blk % 256 == 0 and c_blk >= 512):
        c_blk //= 2
    n_c = pl.cdiv(c, c_blk)
    n_red = pl.cdiv(hw, red_blk)

    if c_on_lanes:
        x_block = (b, red_blk, c_blk)
        x_map = lambda i, k, j: (i, j, k)
    else:
        x_block = (b, c_blk, red_blk)
        x_map = lambda i, k, j: (i, k, j)
    out_block = (b, c_blk)
    out_map = lambda i, k, j: (i, k)

    # Scoped VMEM limit: double-buffered input + output + f32 accumulators,
    # capped below physical VMEM of the current generation.
    per_step = (2 * in_block_bytes(b, c_blk, red_blk)
                + 2 * b * c_blk * itemsize
                + 2 * b * c_blk * 4)
    vmem_limit = int(min(max(32 << 20, 2 * per_step), int(0.9 * vmem_cap)))

    flops = n * c * hw * (2 if pooling == "combined" else 1)
    bytes_accessed = n * c * hw * itemsize + n * c * itemsize
    cost = pl.CostEstimate(flops=flops, transcendentals=0,
                           bytes_accessed=bytes_accessed)

    kernel = functools.partial(_pool_kernel, pooling=pooling,
                               reduce_axis=reduce_axis, red_size=hw,
                               red_blk=red_blk)

    emb = pl.pallas_call(
        kernel,
        out_shape=jax.ShapeDtypeStruct((n, c), dtype),
        grid=(n_b, n_c, n_red),
        in_specs=[pl.BlockSpec(x_block, x_map)],
        out_specs=pl.BlockSpec(out_block, out_map),
        scratch_shapes=[pltpu.VMEM((b, c_blk), jnp.float32),
                        pltpu.VMEM((b, c_blk), jnp.float32)],
        compiler_params=pltpu.CompilerParams(
            dimension_semantics=("parallel", "parallel", "arbitrary"),
            vmem_limit_bytes=vmem_limit,
        ),
        cost_estimate=cost,
    )(x)

    endpoints["triplet"] = [emb]
    return endpoints, emb


def create_endpoints():
    return {"triplet": None}


if __name__ == "__main__":
    key = jax.random.PRNGKey(0)

    def ref(x, pooling):
        xf = x.astype(jnp.float32)
        mx = jnp.max(xf, axis=(2, 3))
        avg = jnp.mean(xf, axis=(2, 3))
        if pooling == "max":
            return mx
        if pooling == "avg":
            return avg
        return mx + avg

    ok = True

    # Primary small-shape check (all pooling modes), NCHW like the module.
    N, C, H, W = 2, 4, 16, 16
    x = jax.random.normal(key, (N, C, H, W), dtype=jnp.float32)
    for pooling in ("max", "avg", "combined"):
        endpoints = create_endpoints()
        endpoints, emb = baseline_reid_branch_forward(x, endpoints,
                                                      pooling=pooling)
        emb = jax.block_until_ready(emb)
        assert emb.shape == (N, C)
        assert endpoints["triplet"][0] is emb
        if not jnp.allclose(emb, ref(x, pooling), atol=1e-5, rtol=1e-5):
            ok = False

    # Lane-dense (C-on-lanes) path with a non-multiple-of-8 spatial size (7x7).
    x2 = jax.random.normal(jax.random.PRNGKey(0), (3, 256, 7, 7),
                           dtype=jnp.float32)
    _, emb2 = baseline_reid_branch_forward(x2, create_endpoints(),
                                           pooling="combined")
    emb2 = jax.block_until_ready(emb2)
    if not jnp.allclose(emb2, ref(x2, "combined"), atol=1e-5, rtol=1e-5):
        ok = False

    # bf16 input, typical ReID aspect (C on lanes, HW = 8*4 = 32).
    x3 = jax.random.normal(jax.random.PRNGKey(0), (2, 256, 8, 4),
                           dtype=jnp.bfloat16)
    _, emb3 = baseline_reid_branch_forward(x3, create_endpoints(),
                                           pooling="combined")
    emb3 = jax.block_until_ready(emb3)
    if not jnp.allclose(emb3.astype(jnp.float32), ref(x3, "combined"),
                        atol=5e-2, rtol=5e-2):
        ok = False

    # Force the streamed-HW fallback (accumulators + ragged-block masking) by
    # shrinking the input budget: hw=144, red_blk becomes 64 -> 3 HW steps.
    x4 = jax.random.normal(jax.random.PRNGKey(0), (2, 256, 12, 12),
                           dtype=jnp.float32)
    _, emb4 = baseline_reid_branch_forward(x4, create_endpoints(),
                                           pooling="combined",
                                           input_budget_bytes=1 << 20)
    emb4 = jax.block_until_ready(emb4)
    if not jnp.allclose(emb4, ref(x4, "combined"), atol=1e-5, rtol=1e-5):
        ok = False

    if ok:
        print("KERNEL_OK")
</pallas_src>

<mosaic_0001>
module attributes {stable_mosaic.version = 11 : i64} {
  func.func @_pool_kernel(%arg0: i32, %arg1: i32, %arg2: i32, %arg3: memref<2x4x256xf32, #tpu.memory_space<vmem>>, %arg4: memref<2x4xf32, #tpu.memory_space<vmem>>, %arg5: memref<2x4xf32, #tpu.memory_space<vmem>>, %arg6: memref<2x4xf32, #tpu.memory_space<vmem>>) attributes {dimension_semantics = [#tpu.dimension_semantics<parallel>, #tpu.dimension_semantics<parallel>, #tpu.dimension_semantics<arbitrary>], iteration_bounds = array<i64: 1, 1, 1>, scalar_prefetch = 0 : i64, scratch_operands = 2 : i64, tpu.core_type = #tpu.core_type<tc>, window_params = [{transform_indices = @transform_0, window_bounds = array<i64: 2, 4, 256>}, {transform_indices = @transform_1, window_bounds = array<i64: 2, 4>}]} {
    %c0_i32 = arith.constant 0 : i32
    %0 = arith.cmpi eq, %arg2, %c0_i32 : i32
    %1 = arith.extui %0 : i1 to i32
    %c0_i32_0 = arith.constant 0 : i32
    %2 = arith.cmpi ne, %1, %c0_i32_0 : i32
    scf.if %2 {
      %cst_9 = arith.constant 0xFF800000 : f32
      %11 = vector.broadcast %cst_9 : f32 to vector<2x4xf32>
      %c0_10 = arith.constant 0 : index
      %c0_11 = arith.constant 0 : index
      %12 = vector.load %arg5[%c0_10, %c0_11] : memref<2x4xf32, #tpu.memory_space<vmem>>, vector<2x4xf32>
      tpu.vector_store %arg5[%c0_10, %c0_11], %11 {strides = array<i32>} : memref<2x4xf32, #tpu.memory_space<vmem>>, vector<2x4xf32>,
    } else {
    }
    %c0 = arith.constant 0 : index
    %c0_1 = arith.constant 0 : index
    %c0_2 = arith.constant 0 : index
    %3 = vector.load %arg3[%c0, %c0_1, %c0_2] : memref<2x4x256xf32, #tpu.memory_space<vmem>>, vector<2x4x256xf32>
    %c0_3 = arith.constant 0 : index
    %c0_4 = arith.constant 0 : index
    %4 = vector.load %arg5[%c0_3, %c0_4] : memref<2x4xf32, #tpu.memory_space<vmem>>, vector<2x4xf32>
    %cst = arith.constant dense<0xFF800000> : vector<2x4xf32>
    %5 = vector.multi_reduction <maximumf>, %3, %cst [2] : vector<2x4x256xf32> to vector<2x4xf32>
    %6 = arith.maximumf %4, %5 : vector<2x4xf32>
    %c0_5 = arith.constant 0 : index
    %c0_6 = arith.constant 0 : index
    %7 = vector.load %arg5[%c0_5, %c0_6] : memref<2x4xf32, #tpu.memory_space<vmem>>, vector<2x4xf32>
    tpu.vector_store %arg5[%c0_5, %c0_6], %6 {strides = array<i32>} : memref<2x4xf32, #tpu.memory_space<vmem>>, vector<2x4xf32>,
    %c0_i32_7 = arith.constant 0 : i32
    %8 = arith.cmpi eq, %arg2, %c0_i32_7 : i32
    %9 = arith.extui %8 : i1 to i32
    %c0_i32_8 = arith.constant 0 : i32
    %10 = arith.cmpi ne, %9, %c0_i32_8 : i32
    scf.if %10 {
      %c0_9 = arith.constant 0 : index
      %c0_10 = arith.constant 0 : index
      %11 = vector.load %arg5[%c0_9, %c0_10] : memref<2x4xf32, #tpu.memory_space<vmem>>, vector<2x4xf32>
      %c0_11 = arith.constant 0 : index
      %c0_12 = arith.constant 0 : index
      %12 = vector.load %arg4[%c0_11, %c0_12] : memref<2x4xf32, #tpu.memory_space<vmem>>, vector<2x4xf32>
      tpu.vector_store %arg4[%c0_11, %c0_12], %11 {strides = array<i32>} : memref<2x4xf32, #tpu.memory_space<vmem>>, vector<2x4xf32>,
    } else {
    }
    return
  }
  func.func @transform_0(%arg0: i32, %arg1: i32, %arg2: i32) -> (i32, i32, i32) {
    %c0_i32 = arith.constant 0 : i32
    return %arg0, %arg1, %arg2 : i32, i32, i32
  }
  func.func @transform_1(%arg0: i32, %arg1: i32, %arg2: i32) -> (i32, i32) {
    %c0_i32 = arith.constant 0 : i32
    return %arg0, %arg1 : i32, i32
  }
}

</mosaic_0001>

<llo_original>
// kernel: tpu_custom_call.1
$region0: #{tpu_custom_call.1}
  #allocation0 [shape = 'u32[]', space=smem, size = 0x4, offset = 0x4, fixed_abs, tag = 'smem constant byte address 0x4 - core index']
  #allocation1 [shape = 'u32[144,128]{1,0:T(1,128)}', space=vmem, size = 0x12000, scoped, tag = 'internal scratch']
  #allocation2 [shape = 'f32[2,4]{1,0:T(2,128)}', space=vmem, size = 0x400, scoped, tag = 'scratch operand']
  #allocation3 [shape = 'f32[2,4]{1,0:T(2,128)}', space=vmem, size = 0x400, scoped, tag = 'scratch operand']
  %s0 = inlined_call_operand.hbm [shape: f32[2,4,256], index: 0, kind: input, shape index: {}]
  %s1 = inlined_call_operand.hbm [shape: f32[2,4], index: 1, kind: output, shape index: {}]
  %s2 = sld [smem:[#allocation0]]
  $region26: #{tpu_custom_call.1} parent=0
    _
  %s4 = ssub.s32 1, %s2
  %s5 = scalar_select 0, %s4, %s2
  $region1: #{tpu_custom_call.1} parent=0
    #allocation4 [shape = 'u8[8192]{0}', space=vmem, size = 0x2000, scoped, tag = 'input window, operand 0, single buffered']
    #allocation5 [shape = 's32[1]{0}', space=sflag, size = 0x4, scoped, tag = 'scoped memory for tpu_custom_call.1']
    #allocation6 [shape = 's32[1]{0}', space=sflag, size = 0x4, scoped, tag = 'scoped memory for tpu_custom_call.1']
    #allocation7 [shape = 'u8[1024]{0}', space=vmem, size = 0x400, scoped, tag = 'output window, operand 0, single buffered']
    %6 = vsyncpa [#allocation5], 0
    %7 = vsyncpa [#allocation6], 0
    // Predicated region
    $region2: #{tpu_custom_call.1} parent=1 // pred_check
      _
    $region3: #{tpu_custom_call.1} parent=1 // pred_check_branch
      %9 = sbr.rel (0) target = $region5
    $region4: #{tpu_custom_call.1} parent=1 // pred_region
      %s11 = ssub.s32 256, 256
      %12 = vsyncadd [#allocation5], %s11
      %s13 = sshll.u32 [#allocation4], 4
      %s14 = int_to_ptr.vmem [resolvable:$true] %s13
      %19 = dma.hbm_to_vmem [thread:$0]  %s0, 256, %s14, [#allocation5], 128, 128, 8
    $region5: #{tpu_custom_call.1} parent=1 // pred_fallthru
      _
    // Predicated region
    $region6: #{tpu_custom_call.1} parent=1 // pred_check
      _
    $region7: #{tpu_custom_call.1} parent=1 // pred_check_branch
      %21 = sbr.rel (0) target = $region9
    $region8: #{tpu_custom_call.1} parent=1 // pred_region
      %22 = dma.done [#allocation5], 256
    $region9: #{tpu_custom_call.1} parent=1 // pred_fallthru
      _
    %p23 = scmp.eq.s32.totalorder 0, 0
    // Predicated region
    $region10: #{tpu_custom_call.1} parent=1 // pred_check
      %p24 = pneg %p23
    $region11: #{tpu_custom_call.1} parent=1 // pred_check_branch
      %26 = sbr.rel (%p24) target = $region13
    $region12: #{tpu_custom_call.1} parent=1 // pred_region
      %vm27 = vcmask 25600
      %28 = vst.msk [vmem:[#allocation2] sm:$0x3] %vm27, -inf
    $region13: #{tpu_custom_call.1} parent=1 // pred_fallthru
      _
    %v29 = vld [vmem:[#allocation4] sm:$0xff]
    %v30 = vld [vmem:[#allocation4 + $0x8] sm:$0xff]
    %v31 = vld [vmem:[#allocation2] sm:$0x3]
    %v34 = vcombine.high %v29, %v29
    %v35 = vcombine.high %v30, %v30
    %vm38 = vcmask 1043456
    %v39 = vsel %vm38, %v29, -inf
    %v40 = vsel %vm38, %v34, -inf
    %v41 = vmax.f32 %v39, %v40
    %42 = vmax.xlane.f32.xlu0 %v41
    %v43 = vpop.xlane.xlu0 %42
    %v44 = vsel %vm38, %v30, -inf
    %v45 = vsel %vm38, %v35, -inf
    %v46 = vmax.f32 %v44, %v45
    %47 = vmax.xlane.f32.xlu0 %v46
    %v48 = vpop.xlane.xlu0 %47
    %v51 = vlaneseq
    %v52 = vand.u32 %v51, 127
    %v53 = vlaneseq
    %v54 = vshrl.u32 %v53, 7
    %v55 = vsub.s32 %v52, %v54
    %v56 = vrot.slane %v43, %v55
    %v57 = vlaneseq
    %v58 = vshrl.u32 %v57, 7
    %v59 = vsub.s32 %v52, %v58
    %v60 = vrot.slane %v48, %v59
    %vm61 = vcmask 1041409
    %v62 = vsel %vm61, %v60, %v56
    %v64 = vmax.f32 %v31, %v62
    %vm65 = vcmask 25600
    %66 = vst.msk [vmem:[#allocation2] sm:$0x3] %vm65, %v64
    // Predicated region
    $region14: #{tpu_custom_call.1} parent=1 // pred_check
      %p67 = pneg %p23
    $region15: #{tpu_custom_call.1} parent=1 // pred_check_branch
      %69 = sbr.rel (%p67) target = $region17
    $region16: #{tpu_custom_call.1} parent=1 // pred_region
      %v70 = vld [vmem:[#allocation2] sm:$0x3]
      %71 = vst.msk [vmem:[#allocation7] sm:$0x3] %vm65, %v70
    $region17: #{tpu_custom_call.1} parent=1 // pred_fallthru
      _
    // Predicated region
    $region18: #{tpu_custom_call.1} parent=1 // pred_check
      _
    $region19: #{tpu_custom_call.1} parent=1 // pred_check_branch
      %73 = sbr.rel (0) target = $region21
    $region20: #{tpu_custom_call.1} parent=1 // pred_region
      %s75 = ssub.s32 32, 32
      %76 = vsyncadd [#allocation6], %s75
      %s78 = sshll.u32 [#allocation7], 4
      %s79 = int_to_ptr.vmem [resolvable:$true] %s78
      %81 = dma.vmem_to_hbm [thread:$0]  %s79, 32, %s1, [#allocation6]
    $region21: #{tpu_custom_call.1} parent=1 // pred_fallthru
      _
    // Predicated region
    $region22: #{tpu_custom_call.1} parent=1 // pred_check
      _
    $region23: #{tpu_custom_call.1} parent=1 // pred_check_branch
      %83 = sbr.rel (0) target = $region25
    $region24: #{tpu_custom_call.1} parent=1 // pred_region
      %84 = dma.done [#allocation6], 32
    $region25: #{tpu_custom_call.1} parent=1 // pred_fallthru
      _
    %85 = vsyncpa [#allocation5], 1
    %86 = vsyncpa [#allocation6], 1

</llo_original>
